<compile_context>
chip_gen: v6e
topology: v6e:2x2x1
jax: 0.10.0
libtpu: 0.0.40
codegen_flags: <defaults>
</compile_context>

<pallas_src>
import functools

import jax
import jax.numpy as jnp
from jax.experimental import pallas as pl
from jax.experimental.pallas import tpu as pltpu

IN_FEATURES = 3 * 3   # encoding_entity_features * encoding_max_entities
HIDDEN = 10
OUT_SIZE = 5


def _round_up(n, m):
    return ((n + m - 1) // m) * m


def _mlp_kernel(x_ref, w1t_ref, b1_ref, w2t_ref, b2_ref, o_ref, *, has_softmax):
    # Batch on lanes, features on sublanes. Upcast to f32 for compute
    # (keeps v5e happy and allows bf16 I/O without changing the kernel).
    x = x_ref[...].astype(jnp.float32)            # (F, TB)
    w1t = w1t_ref[...].astype(jnp.float32)        # (H, F)
    w2t = w2t_ref[...].astype(jnp.float32)        # (O, H)
    b1 = b1_ref[...].astype(jnp.float32)          # (H, 1)
    b2 = b2_ref[...].astype(jnp.float32)          # (O, 1)

    h = jnp.dot(w1t, x, preferred_element_type=jnp.float32) + b1   # (H, TB)
    h = jnp.maximum(h, 0.0)
    y = jnp.dot(w2t, h, preferred_element_type=jnp.float32) + b2   # (O, TB)

    if has_softmax:
        # Softmax over the (small) output-feature axis, now on sublanes.
        m = jnp.max(y, axis=0, keepdims=True)
        e = jnp.exp(y - m)
        y = e * pl.reciprocal(jnp.sum(e, axis=0, keepdims=True), approx=True)

    o_ref[...] = y.astype(o_ref.dtype)


def mlp_forward(x, w1, b1, w2, b2, *, has_softmax=False, block_b=512):
    """x: (B, 9); w1: (9, 10); b1: (10,); w2: (10, out); b2: (out,). Returns (B, out)."""
    B, F = x.shape
    O = w2.shape[1]

    # Batch tile on the lane axis: multiple of 128, shrunk for small batches,
    # capped at `block_b` (default 512 — safe on v7x's smaller VMEM).
    block = max(128, min(block_b, _round_up(B, 128)))
    B_pad = _round_up(B, block)

    # Layout plumbing (done once in the wrapper, not per grid step):
    x_t = x.T                                     # (F, B)  batch -> lanes
    if B_pad != B:
        x_t = jnp.pad(x_t, ((0, 0), (0, B_pad - B)))
    w1_t = w1.T                                   # (H, F)
    w2_t = w2.T                                   # (O, H)
    b1_c = b1.reshape(-1, 1)                      # (H, 1)  broadcast across lanes
    b2_c = b2.reshape(-1, 1)                      # (O, 1)

    kernel = functools.partial(_mlp_kernel, has_softmax=has_softmax)

    y_t = pl.pallas_call(
        kernel,
        out_shape=jax.ShapeDtypeStruct((O, B_pad), x.dtype),
        grid=(B_pad // block,),
        in_specs=[
            pl.BlockSpec((F, block), lambda i: (0, i)),    # new batch tile each step
            pl.BlockSpec(w1_t.shape, lambda i: (0, 0)),    # weights/biases resident
            pl.BlockSpec(b1_c.shape, lambda i: (0, 0)),
            pl.BlockSpec(w2_t.shape, lambda i: (0, 0)),
            pl.BlockSpec(b2_c.shape, lambda i: (0, 0)),
        ],
        out_specs=pl.BlockSpec((O, block), lambda i: (0, i)),
        compiler_params=pltpu.CompilerParams(
            dimension_semantics=("parallel",),             # megacore sharding on v7x
        ),
    )(x_t, w1_t, b1_c, w2_t, b2_c)

    return y_t[:, :B].T                                    # back to (B, out)


def init_params(key, in_features=IN_FEATURES, hidden=HIDDEN, out_size=OUT_SIZE):
    """Deterministic init mimicking PyTorch Linear default (U(-1/sqrt(fan_in), ..))."""
    k1, k2, k3, k4 = jax.random.split(key, 4)
    bound1 = 1.0 / jnp.sqrt(in_features)
    bound2 = 1.0 / jnp.sqrt(hidden)
    w1 = jax.random.uniform(k1, (in_features, hidden), jnp.float32, -bound1, bound1)
    b1 = jax.random.uniform(k2, (hidden,), jnp.float32, -bound1, bound1)
    w2 = jax.random.uniform(k3, (hidden, out_size), jnp.float32, -bound2, bound2)
    b2 = jax.random.uniform(k4, (out_size,), jnp.float32, -bound2, bound2)
    return w1, b1, w2, b2


def reference_forward(x, w1, b1, w2, b2, *, has_softmax=False):
    h = jnp.maximum(x @ w1 + b1, 0.0)
    y = h @ w2 + b2
    if has_softmax:
        y = jax.nn.softmax(y, axis=-1)
    return y


if __name__ == "__main__":
    key = jax.random.PRNGKey(0)
    k_params, k_x1, k_x2 = jax.random.split(key, 3)
    w1, b1, w2, b2 = init_params(k_params)

    # 1) Small batch, no softmax (matches PyTorch module defaults).
    batch = 8
    x = jax.random.normal(k_x1, (batch, IN_FEATURES), jnp.float32)
    y = jax.block_until_ready(mlp_forward(x, w1, b1, w2, b2, has_softmax=False))
    y_ref = reference_forward(x, w1, b1, w2, b2, has_softmax=False)
    assert y.shape == (batch, OUT_SIZE)
    assert jnp.allclose(y, y_ref, atol=1e-4, rtol=1e-4), "mismatch vs reference (no softmax)"

    # 2) Softmax head (approx reciprocal -> slightly looser tolerance).
    ys = jax.block_until_ready(mlp_forward(x, w1, b1, w2, b2, has_softmax=True))
    ys_ref = reference_forward(x, w1, b1, w2, b2, has_softmax=True)
    assert jnp.allclose(ys, ys_ref, atol=2e-2, rtol=2e-2), "mismatch vs reference (softmax)"

    # 3) Multi-tile grid + batch padding path (B not a multiple of the tile).
    batch2 = 300
    x2 = jax.random.normal(k_x2, (batch2, IN_FEATURES), jnp.float32)
    y2 = jax.block_until_ready(
        mlp_forward(x2, w1, b1, w2, b2, has_softmax=False, block_b=128))
    y2_ref = reference_forward(x2, w1, b1, w2, b2, has_softmax=False)
    assert y2.shape == (batch2, OUT_SIZE)
    assert jnp.allclose(y2, y2_ref, atol=1e-4, rtol=1e-4), "mismatch vs reference (tiled)"

    print("KERNEL_OK")
</pallas_src>

<mosaic_0001>
module attributes {stable_mosaic.version = 11 : i64} {
  func.func @_mlp_kernel(%arg0: i32, %arg1: memref<9x128xf32, #tpu.memory_space<vmem>>, %arg2: memref<10x9xf32, #tpu.memory_space<vmem>>, %arg3: memref<10x1xf32, #tpu.memory_space<vmem>>, %arg4: memref<5x10xf32, #tpu.memory_space<vmem>>, %arg5: memref<5x1xf32, #tpu.memory_space<vmem>>, %arg6: memref<5x128xf32, #tpu.memory_space<vmem>>) attributes {dimension_semantics = [#tpu.dimension_semantics<parallel>], iteration_bounds = array<i64: 1>, scalar_prefetch = 0 : i64, scratch_operands = 0 : i64, tpu.core_type = #tpu.core_type<tc>, window_params = [{transform_indices = @transform_0, window_bounds = array<i64: 9, 128>}, {pipeline_mode = #tpu.pipeline_mode<synchronous>, transform_indices = @transform_1, window_bounds = array<i64: 10, 9>}, {pipeline_mode = #tpu.pipeline_mode<synchronous>, transform_indices = @transform_2, window_bounds = array<i64: 10, 1>}, {pipeline_mode = #tpu.pipeline_mode<synchronous>, transform_indices = @transform_3, window_bounds = array<i64: 5, 10>}, {pipeline_mode = #tpu.pipeline_mode<synchronous>, transform_indices = @transform_4, window_bounds = array<i64: 5, 1>}, {transform_indices = @transform_5, window_bounds = array<i64: 5, 128>}]} {
    %c0 = arith.constant 0 : index
    %c0_0 = arith.constant 0 : index
    %0 = vector.load %arg1[%c0, %c0_0] : memref<9x128xf32, #tpu.memory_space<vmem>>, vector<9x128xf32>
    %c0_1 = arith.constant 0 : index
    %c0_2 = arith.constant 0 : index
    %1 = vector.load %arg2[%c0_1, %c0_2] : memref<10x9xf32, #tpu.memory_space<vmem>>, vector<10x9xf32>
    %c0_3 = arith.constant 0 : index
    %c0_4 = arith.constant 0 : index
    %2 = vector.load %arg4[%c0_3, %c0_4] : memref<5x10xf32, #tpu.memory_space<vmem>>, vector<5x10xf32>
    %c0_5 = arith.constant 0 : index
    %c0_6 = arith.constant 0 : index
    %3 = vector.load %arg3[%c0_5, %c0_6] : memref<10x1xf32, #tpu.memory_space<vmem>>, vector<10x1xf32>
    %c0_7 = arith.constant 0 : index
    %c0_8 = arith.constant 0 : index
    %4 = vector.load %arg5[%c0_7, %c0_8] : memref<5x1xf32, #tpu.memory_space<vmem>>, vector<5x1xf32>
    %cst = arith.constant dense<0.000000e+00> : vector<10x128xf32>
    %5 = tpu.matmul %1, %0, %cst {dimension_numbers = #tpu.dot_dimension_numbers<[1], [0], [0], [1], [0, 0, 1, 1], [], []>} : vector<10x9xf32>, vector<9x128xf32>, vector<10x128xf32> -> vector<10x128xf32>
    %6 = vector.broadcast %3 : vector<10x1xf32> to vector<10x128xf32>
    %7 = arith.addf %5, %6 : vector<10x128xf32>
    %cst_9 = arith.constant 0.000000e+00 : f32
    %8 = vector.broadcast %cst_9 : f32 to vector<10x128xf32>
    %9 = arith.maximumf %7, %8 : vector<10x128xf32>
    %cst_10 = arith.constant dense<0.000000e+00> : vector<5x128xf32>
    %10 = tpu.matmul %2, %9, %cst_10 {dimension_numbers = #tpu.dot_dimension_numbers<[1], [0], [0], [1], [0, 0, 1, 1], [], []>} : vector<5x10xf32>, vector<10x128xf32>, vector<5x128xf32> -> vector<5x128xf32>
    %11 = vector.broadcast %4 : vector<5x1xf32> to vector<5x128xf32>
    %12 = arith.addf %10, %11 : vector<5x128xf32>
    %c0_11 = arith.constant 0 : index
    %c0_12 = arith.constant 0 : index
    %13 = vector.load %arg6[%c0_11, %c0_12] : memref<5x128xf32, #tpu.memory_space<vmem>>, vector<5x128xf32>
    tpu.vector_store %arg6[%c0_11, %c0_12], %12 {strides = array<i32>} : memref<5x128xf32, #tpu.memory_space<vmem>>, vector<5x128xf32>,
    return
  }
  func.func @transform_0(%arg0: i32) -> (i32, i32) {
    %c0_i32 = arith.constant 0 : i32
    %c0_i32_0 = arith.constant 0 : i32
    return %c0_i32, %arg0 : i32, i32
  }
  func.func @transform_1(%arg0: i32) -> (i32, i32) {
    %c0_i32 = arith.constant 0 : i32
    %c0_i32_0 = arith.constant 0 : i32
    %c0_i32_1 = arith.constant 0 : i32
    return %c0_i32, %c0_i32_0 : i32, i32
  }
  func.func @transform_2(%arg0: i32) -> (i32, i32) {
    %c0_i32 = arith.constant 0 : i32
    %c0_i32_0 = arith.constant 0 : i32
    %c0_i32_1 = arith.constant 0 : i32
    return %c0_i32, %c0_i32_0 : i32, i32
  }
  func.func @transform_3(%arg0: i32) -> (i32, i32) {
    %c0_i32 = arith.constant 0 : i32
    %c0_i32_0 = arith.constant 0 : i32
    %c0_i32_1 = arith.constant 0 : i32
    return %c0_i32, %c0_i32_0 : i32, i32
  }
  func.func @transform_4(%arg0: i32) -> (i32, i32) {
    %c0_i32 = arith.constant 0 : i32
    %c0_i32_0 = arith.constant 0 : i32
    %c0_i32_1 = arith.constant 0 : i32
    return %c0_i32, %c0_i32_0 : i32, i32
  }
  func.func @transform_5(%arg0: i32) -> (i32, i32) {
    %c0_i32 = arith.constant 0 : i32
    %c0_i32_0 = arith.constant 0 : i32
    return %c0_i32, %arg0 : i32, i32
  }
}

</mosaic_0001>

<llo_original>
// kernel: tpu_custom_call.1
$region0: #{tpu_custom_call.1}
  #allocation0 [shape = 'u32[]', space=smem, size = 0x4, offset = 0x4, fixed_abs, tag = 'smem constant byte address 0x4 - core index']
  #allocation1 [shape = 'u32[144,128]{1,0:T(1,128)}', space=vmem, size = 0x12000, scoped, tag = 'internal scratch']
  %s0 = inlined_call_operand.vmem [shape: f32[9,128], index: 0, kind: input, shape index: {}]
  %s1 = inlined_call_operand.hbm [shape: f32[10,9], index: 1, kind: input, shape index: {}]
  %s2 = inlined_call_operand.vmem [shape: f32[10,1], index: 2, kind: input, shape index: {}]
  %s3 = inlined_call_operand.vmem [shape: f32[5,10], index: 3, kind: input, shape index: {}]
  %s4 = inlined_call_operand.vmem [shape: f32[5,1], index: 4, kind: input, shape index: {}]
  %s5 = inlined_call_operand.hbm [shape: f32[5,128], index: 5, kind: output, shape index: {}]
  %s6 = sld [smem:[#allocation0]]
  $region34: #{tpu_custom_call.1} parent=0
    _
  %s8 = ssub.s32 1, %s6
  %s9 = scalar_select 0, %s8, %s6
  $region1: #{tpu_custom_call.1} parent=0
    #allocation2 [shape = 'u8[8192]{0}', space=vmem, size = 0x2000, scoped, tag = 'input window, operand 1, single buffered']
    #allocation3 [shape = 's32[1]{0}', space=sflag, size = 0x4, scoped, tag = 'scoped memory for tpu_custom_call.1']
    #allocation4 [shape = 's32[1]{0}', space=sflag, size = 0x4, scoped, tag = 'scoped memory for tpu_custom_call.1']
    #allocation5 [shape = 'u8[4096]{0}', space=vmem, size = 0x1000, scoped, tag = 'output window, operand 0, single buffered']
    %10 = vsyncpa [#allocation3], 0
    %11 = vsyncpa [#allocation4], 0
    // Predicated region
    $region2: #{tpu_custom_call.1} parent=1 // pred_check
      _
    $region3: #{tpu_custom_call.1} parent=1 // pred_check_branch
      %13 = sbr.rel (0) target = $region5
    $region4: #{tpu_custom_call.1} parent=1 // pred_region
      _
    $region5: #{tpu_custom_call.1} parent=1 // pred_fallthru
      _
    // Predicated region
    $region6: #{tpu_custom_call.1} parent=1 // pred_check
      _
    $region7: #{tpu_custom_call.1} parent=1 // pred_check_branch
      %15 = sbr.rel (0) target = $region9
    $region8: #{tpu_custom_call.1} parent=1 // pred_region
      %s17 = ssub.s32 256, 256
      %18 = vsyncadd [#allocation3], %s17
      %s19 = sshll.u32 [#allocation2], 4
      %s20 = int_to_ptr.vmem [resolvable:$true] %s19
      %25 = dma.hbm_to_vmem [thread:$0]  %s1, 256, %s20, [#allocation3], 128, 128, 8
    $region9: #{tpu_custom_call.1} parent=1 // pred_fallthru
      _
    // Predicated region
    $region10: #{tpu_custom_call.1} parent=1 // pred_check
      _
    $region11: #{tpu_custom_call.1} parent=1 // pred_check_branch
      %27 = sbr.rel (0) target = $region13
    $region12: #{tpu_custom_call.1} parent=1 // pred_region
      _
    $region13: #{tpu_custom_call.1} parent=1 // pred_fallthru
      _
    // Predicated region
    $region14: #{tpu_custom_call.1} parent=1 // pred_check
      _
    $region15: #{tpu_custom_call.1} parent=1 // pred_check_branch
      %29 = sbr.rel (0) target = $region17
    $region16: #{tpu_custom_call.1} parent=1 // pred_region
      _
    $region17: #{tpu_custom_call.1} parent=1 // pred_fallthru
      _
    // Predicated region
    $region18: #{tpu_custom_call.1} parent=1 // pred_check
      _
    $region19: #{tpu_custom_call.1} parent=1 // pred_check_branch
      %31 = sbr.rel (0) target = $region21
    $region20: #{tpu_custom_call.1} parent=1 // pred_region
      _
    $region21: #{tpu_custom_call.1} parent=1 // pred_fallthru
      _
    // Predicated region
    $region22: #{tpu_custom_call.1} parent=1 // pred_check
      _
    $region23: #{tpu_custom_call.1} parent=1 // pred_check_branch
      %33 = sbr.rel (0) target = $region25
    $region24: #{tpu_custom_call.1} parent=1 // pred_region
      %34 = dma.done [#allocation3], 256
    $region25: #{tpu_custom_call.1} parent=1 // pred_fallthru
      _
    %v35 = vld [vmem:[%s0] sm:$0xff]
    %v36 = vld [vmem:[%s0 + $0x8] sm:$0x1]
    %v37 = vld [vmem:[#allocation2] sm:$0xff]
    %v38 = vld [vmem:[#allocation2 + $0x8] sm:$0x3]
    %v39 = vld [vmem:[%s3] sm:$0x1f]
    %v40 = vld [vmem:[%s2] sm:$0xff]
    %v41 = vld [vmem:[%s2 + $0x8] sm:$0x3]
    %v42 = vld [vmem:[%s4] sm:$0x1f]
    %44 = vset.pattern.permute.xlu0 0
    %45 = vperm.xlu0 %44, %v40
    %v46 = vpop.permute.xlu0 %45
    %49 = vset.pattern.permute.xlu0 0
    %50 = vperm.xlu0 %49, %v41
    %v51 = vpop.permute.xlu0 %50
    %vm53 = vcmask 72704
    %v55 = vsel %vm53, %v37, 0
    %v58 = vsel %vm53, %v38, 0
    %vm60 = vcmask 1040384
    %v62 = vsel %vm60, %v36, 0
    %64 = vmatprep.subr.mxu0 0.0
    %65 = vmatpush1.msra.mxu0 0.0
    %66 = vmatprep.subr.mxu0 0.0
    %67 = vmatpush1.msra.mxu0 0.0
    %68 = vmatprep.subr.mxu0 0.0
    %69 = vmatpush1.msra.mxu0 0.0
    %70 = vmatprep.subr.mxu0 0.0
    %71 = vmatpush1.msra.mxu0 0.0
    %72 = vmatprep.subr.mxu0 0.0
    %73 = vmatpush1.msra.mxu0 0.0
    %74 = vmatprep.subr.mxu0 0.0
    %75 = vmatpush1.msra.mxu0 0.0
    %76 = vmatprep.subr.mxu0 0.0
    %77 = vmatpush1.msra.mxu0 0.0
    %78 = vmatprep.subr.mxu0 0.0
    %79 = vmatpush1.msra.mxu0 0.0
    %80 = vmatprep.subr.mxu0 0.0
    %81 = vmatpush1.msra.mxu0 0.0
    %82 = vmatprep.subr.mxu0 0.0
    %83 = vmatpush1.msra.mxu0 0.0
    %84 = vmatprep.subr.mxu0 0.0
    %85 = vmatpush1.msra.mxu0 0.0
    %86 = vmatprep.subr.mxu0 0.0
    %87 = vmatpush1.msra.mxu0 0.0
    %88 = vmatprep.subr.mxu0 0.0
    %89 = vmatpush1.msra.mxu0 0.0
    %90 = vmatprep.subr.mxu0 0.0
    %91 = vmatpush1.msra.mxu0 0.0
    %92 = vmatprep.subr.mxu0 0.0
    %93 = vmatpush1.msra.mxu0 %v62
    %94 = vmatprep.subr.mxu0 0.0
    %95 = vmatpush1.msra.mxu0 %v35
    %96 = vmatprep.subr.mxu0 0.0
    %97 = vmatpush2.msra.mxu0 0.0
    %98 = vmatprep.subr.mxu0 0.0
    %99 = vmatpush2.msra.mxu0 0.0
    %100 = vmatprep.subr.mxu0 0.0
    %101 = vmatpush2.msra.mxu0 0.0
    %102 = vmatprep.subr.mxu0 0.0
    %103 = vmatpush2.msra.mxu0 0.0
    %104 = vmatprep.subr.mxu0 0.0
    %105 = vmatpush2.msra.mxu0 0.0
    %106 = vmatprep.subr.mxu0 0.0
    %107 = vmatpush2.msra.mxu0 0.0
    %108 = vmatprep.subr.mxu0 0.0
    %109 = vmatpush2.msra.mxu0 0.0
    %110 = vmatprep.subr.mxu0 0.0
    %111 = vmatpush2.msra.mxu0 0.0
    %112 = vmatprep.subr.mxu0 0.0
    %113 = vmatpush2.msra.mxu0 0.0
    %114 = vmatprep.subr.mxu0 0.0
    %115 = vmatpush2.msra.mxu0 0.0
    %116 = vmatprep.subr.mxu0 0.0
    %117 = vmatpush2.msra.mxu0 0.0
    %118 = vmatprep.subr.mxu0 0.0
    %119 = vmatpush2.msra.mxu0 0.0
    %120 = vmatprep.subr.mxu0 0.0
    %121 = vmatpush2.msra.mxu0 0.0
    %122 = vmatprep.subr.mxu0 0.0
    %123 = vmatpush2.msra.mxu0 0.0
    %124 = vmatprep.subr.mxu0 0.0
    %125 = vmatpush2.msra.mxu0 0.0
    %126 = vmatprep.subr.mxu0 0.0
    %127 = vmatpush2.msra.mxu0 0.0
    %128 = vmatprep.mubr.f32.mxu0 0.0
    %129 = vmatmul.mubr.f32.gmra.mxu0 %v55
    %v130 = vpop.f32.mrf.mxu0
    %v131 = vadd.f32 %v46, %v130
    %v132 = vpop.f32.mrf.mxu0
    %133 = vmatprep.mubr.f32.mxu0 0.0
    %134 = vmatmul.mubr.f32.gmra.mxu0 %v58
    %v135 = vpop.f32.mrf.mxu0
    %v136 = vadd.f32 %v51, %v135
    %v137 = vpop.f32.mrf.mxu0
    %138 = vdwg.mxu0
    %v139 = vmax.f32 %v131, 0.0
    %v140 = vmax.f32 %v136, 0.0
    %142 = vset.pattern.permute.xlu0 0
    %143 = vperm.xlu0 %142, %v42
    %v144 = vpop.permute.xlu0 %143
    %vm146 = vcmask 80896
    %v148 = vsel %vm146, %v39, 0
    %vm150 = vcmask 1041408
    %v152 = vsel %vm150, %v140, 0
    %154 = vmatprep.subr.mxu0 0.0
    %155 = vmatpush1.msra.mxu0 0.0
    %156 = vmatprep.subr.mxu0 0.0
    %157 = vmatpush1.msra.mxu0 0.0
    %158 = vmatprep.subr.mxu0 0.0
    %159 = vmatpush1.msra.mxu0 0.0
    %160 = vmatprep.subr.mxu0 0.0
    %161 = vmatpush1.msra.mxu0 0.0
    %162 = vmatprep.subr.mxu0 0.0
    %163 = vmatpush1.msra.mxu0 0.0
    %164 = vmatprep.subr.mxu0 0.0
    %165 = vmatpush1.msra.mxu0 0.0
    %166 = vmatprep.subr.mxu0 0.0
    %167 = vmatpush1.msra.mxu0 0.0
    %168 = vmatprep.subr.mxu0 0.0
    %169 = vmatpush1.msra.mxu0 0.0
    %170 = vmatprep.subr.mxu0 0.0
    %171 = vmatpush1.msra.mxu0 0.0
    %172 = vmatprep.subr.mxu0 0.0
    %173 = vmatpush1.msra.mxu0 0.0
    %174 = vmatprep.subr.mxu0 0.0
    %175 = vmatpush1.msra.mxu0 0.0
    %176 = vmatprep.subr.mxu0 0.0
    %177 = vmatpush1.msra.mxu0 0.0
    %178 = vmatprep.subr.mxu0 0.0
    %179 = vmatpush1.msra.mxu0 0.0
    %180 = vmatprep.subr.mxu0 0.0
    %181 = vmatpush1.msra.mxu0 0.0
    %182 = vmatprep.subr.mxu0 0.0
    %183 = vmatpush1.msra.mxu0 %v152
    %184 = vmatprep.subr.mxu0 0.0
    %185 = vmatpush1.msra.mxu0 %v139
    %186 = vmatprep.subr.mxu0 0.0
    %187 = vmatpush2.msra.mxu0 0.0
    %188 = vmatprep.subr.mxu0 0.0
    %189 = vmatpush2.msra.mxu0 0.0
    %190 = vmatprep.subr.mxu0 0.0
    %191 = vmatpush2.msra.mxu0 0.0
    %192 = vmatprep.subr.mxu0 0.0
    %193 = vmatpush2.msra.mxu0 0.0
    %194 = vmatprep.subr.mxu0 0.0
    %195 = vmatpush2.msra.mxu0 0.0
    %196 = vmatprep.subr.mxu0 0.0
    %197 = vmatpush2.msra.mxu0 0.0
    %198 = vmatprep.subr.mxu0 0.0
    %199 = vmatpush2.msra.mxu0 0.0
    %200 = vmatprep.subr.mxu0 0.0
    %201 = vmatpush2.msra.mxu0 0.0
    %202 = vmatprep.subr.mxu0 0.0
    %203 = vmatpush2.msra.mxu0 0.0
    %204 = vmatprep.subr.mxu0 0.0
    %205 = vmatpush2.msra.mxu0 0.0
    %206 = vmatprep.subr.mxu0 0.0
    %207 = vmatpush2.msra.mxu0 0.0
    %208 = vmatprep.subr.mxu0 0.0
    %209 = vmatpush2.msra.mxu0 0.0
    %210 = vmatprep.subr.mxu0 0.0
    %211 = vmatpush2.msra.mxu0 0.0
    %212 = vmatprep.subr.mxu0 0.0
    %213 = vmatpush2.msra.mxu0 0.0
    %214 = vmatprep.subr.mxu0 0.0
    %215 = vmatpush2.msra.mxu0 0.0
    %216 = vmatprep.subr.mxu0 0.0
    %217 = vmatpush2.msra.mxu0 0.0
    %218 = vmatprep.mubr.f32.mxu0 0.0
    %219 = vmatmul.mubr.f32.gmra.mxu0 %v148
    %v220 = vpop.f32.mrf.mxu0
    %v221 = vadd.f32 %v144, %v220
    %v222 = vpop.f32.mrf.mxu0
    %223 = vdwg.mxu0
    %224 = vst [vmem:[#allocation5] sm:$0x1f] %v221
    // Predicated region
    $region26: #{tpu_custom_call.1} parent=1 // pred_check
      _
    $region27: #{tpu_custom_call.1} parent=1 // pred_check_branch
      %226 = sbr.rel (0) target = $region29
    $region28: #{tpu_custom_call.1} parent=1 // pred_region
      %s228 = ssub.s32 128, 128
      %229 = vsyncadd [#allocation4], %s228
      %s231 = sshll.u32 [#allocation5], 4
      %s232 = int_to_ptr.vmem [resolvable:$true] %s231
      %234 = dma.vmem_to_hbm [thread:$0]  %s232, 128, %s5, [#allocation4]
    $region29: #{tpu_custom_call.1} parent=1 // pred_fallthru
      _
    // Predicated region
    $region30: #{tpu_custom_call.1} parent=1 // pred_check
      _
    $region31: #{tpu_custom_call.1} parent=1 // pred_check_branch
      %236 = sbr.rel (0) target = $region33
    $region32: #{tpu_custom_call.1} parent=1 // pred_region
      %237 = dma.done [#allocation4], 128
    $region33: #{tpu_custom_call.1} parent=1 // pred_fallthru
      _
    %238 = vsyncpa [#allocation3], 1
    %239 = vsyncpa [#allocation4], 1

</llo_original>
